<compile_context>
chip_gen: v5e
topology: v5e:2x2
jax: 0.10.0
libtpu: 0.0.40
codegen_flags: <defaults>
</compile_context>

<pallas_src>
import jax
import jax.numpy as jnp
from jax.experimental import pallas as pl
from jax.experimental.pallas import tpu as pltpu


def _round_up(x, m):
    return (x + m - 1) // m * m


# ------------------------------ Pallas wrapper --------------------------------

def pointnet_feat(pointcloud, params, *, tile_n=1024, pack_m=256):
    """pointcloud: [B, N, 3] f32 -> (global feature [B, 1024] f32, n64 [B, N, 64] f32)."""
    B, N, C = pointcloud.shape
    assert C == 3
    (w1, b1), (w2, b2), (w3, b3), (w4, b4), (w5, b5) = params

    CIN = 8                                                        # pad K of layer 1: 3 -> 8
    TN = max(8, _round_up(min(tile_n, _round_up(N, 8)), 8))        # point tile, multiple of 8
    N_pad = _round_up(N, TN)
    num_n = N_pad // TN
    TB = max(1, min(B, pack_m // TN))                              # batches packed per step
    B_pad = _round_up(B, TB)
    num_b = B_pad // TB
    M = TB * TN                                                    # matmul M per grid step
    rem = N - (num_n - 1) * TN                                     # valid rows in last tile

    # --- wrapper-side layout plumbing (pure reshapes in practice: TB>1 => num_n==1) ---
    xp = jnp.pad(pointcloud, ((0, B_pad - B), (0, N_pad - N), (0, CIN - C)))
    xf = (xp.reshape(num_b, TB, num_n, TN, CIN)
            .transpose(0, 2, 1, 3, 4)
            .reshape(num_b * num_n, M, CIN))                       # [steps, M, 8]

    bf16 = jnp.bfloat16
    w1p = jnp.zeros((CIN, 64), jnp.float32).at[:C, :].set(w1).astype(bf16)
    w2b, w3b, w4b, w5b = (w.astype(bf16) for w in (w2, w3, w4, w5))

    def kernel(x_ref, w1_ref, b1_ref, w2_ref, b2_ref, w3_ref, b3_ref,
               w4_ref, b4_ref, w5_ref, b5_ref, gf_ref, n64_ref):
        n = pl.program_id(1)

        @pl.when(n == 0)
        def _init():                                   # gf block is resident across the n axis
            gf_ref[...] = jnp.full(gf_ref.shape, -jnp.inf, gf_ref.dtype)

        x = x_ref[0].astype(bf16)                      # [M, 8]

        # ---- mlp1: Conv(3,64)+BN(folded)+ReLU ; Conv(64,64) ----
        h = jnp.dot(x, w1_ref[...], preferred_element_type=jnp.float32) + b1_ref[...]
        h = jnp.maximum(h, 0.0).astype(bf16)
        n64 = jnp.dot(h, w2_ref[...], preferred_element_type=jnp.float32) + b2_ref[...]

        # ---- mlp2: Conv(64,64)+BN+ReLU ; Conv(64,128)+BN+ReLU ; Conv(128,1024) ----
        h = n64.astype(bf16)
        h = jnp.dot(h, w3_ref[...], preferred_element_type=jnp.float32) + b3_ref[...]
        h = jnp.maximum(h, 0.0).astype(bf16)
        h = jnp.dot(h, w4_ref[...], preferred_element_type=jnp.float32) + b4_ref[...]
        h = jnp.maximum(h, 0.0).astype(bf16)
        h = jnp.dot(h, w5_ref[...], preferred_element_type=jnp.float32)   # [M, 1024]
        # NOTE: b5 is added after the max pool (per-channel bias commutes with row-max).

        # per packed batch element: point-feature writeback + running max pool
        for j in range(TB):                            # static; TB is small
            n64_ref[j] = n64[j * TN:(j + 1) * TN, :].astype(n64_ref.dtype)

            seg = h[j * TN:(j + 1) * TN, :]            # [TN, 1024]
            gm = jnp.max(seg, axis=0, keepdims=True)   # [1, 1024]
            if rem != TN:                              # ragged last tile (static branch)
                gm_valid = jnp.max(seg[:rem, :], axis=0, keepdims=True)
                gm = jnp.where(n == num_n - 1, gm_valid, gm)
            row = gf_ref[pl.ds(j, 1), :]
            gf_ref[pl.ds(j, 1), :] = jnp.maximum(row, gm)

        @pl.when(n == num_n - 1)
        def _finalize():
            gf_ref[...] = gf_ref[...] + b5_ref[...]

    def w_spec(arr):
        return pl.BlockSpec(arr.shape, lambda b, n: (0, 0))

    in_specs = [
        pl.BlockSpec((1, M, CIN), lambda b, n: (b * num_n + n, 0, 0)),
        w_spec(w1p), w_spec(b1), w_spec(w2b), w_spec(b2),
        w_spec(w3b), w_spec(b3), w_spec(w4b), w_spec(b4),
        w_spec(w5b), w_spec(b5),
    ]
    out_specs = (
        pl.BlockSpec((TB, 1024), lambda b, n: (b, 0)),     # resident max-pool accumulator
        pl.BlockSpec((TB, TN, 64), lambda b, n: (b, n, 0)),
    )
    out_shape = (
        jax.ShapeDtypeStruct((B_pad, 1024), jnp.float32),
        jax.ShapeDtypeStruct((B_pad, N_pad, 64), jnp.float32),
    )

    per_point_flops = 2 * (CIN * 64 + 64 * 64 + 64 * 64 + 64 * 128 + 128 * 1024)
    cost = pl.CostEstimate(
        flops=B_pad * N_pad * per_point_flops,
        transcendentals=0,
        bytes_accessed=(xf.size * 4 + B_pad * 1024 * 4 + B_pad * N_pad * 64 * 4
                        + 2 * sum(w.size for w in (w1p, w2b, w3b, w4b, w5b))
                        + 4 * sum(b.size for b in (b1, b2, b3, b4, b5))),
    )

    gf, n64 = pl.pallas_call(
        kernel,
        out_shape=out_shape,
        grid_spec=pltpu.PrefetchScalarGridSpec(
            num_scalar_prefetch=0,
            grid=(num_b, num_n),
            in_specs=in_specs,
            out_specs=out_specs,
        ),
        compiler_params=pltpu.CompilerParams(
            dimension_semantics=("parallel", "arbitrary")),
        cost_estimate=cost,
    )(xf, w1p, b1, w2b, b2, w3b, b3, w4b, b4, w5b, b5)

    return gf[:B], n64[:B, :N]


# --------------------- deterministic parameter setup --------------------------

def _conv1x1(key, cin, cout):
    """PyTorch Conv1d(cin, cout, 1) init; returned as [cin, cout] / [cout]."""
    kw, kb = jax.random.split(key)
    bound = 1.0 / jnp.sqrt(cin)
    w = jax.random.uniform(kw, (cin, cout), jnp.float32, -bound, bound)
    b = jax.random.uniform(kb, (cout,), jnp.float32, -bound, bound)
    return w, b


def _bn(key, c):
    kg, kb, km, kv = jax.random.split(key, 4)
    gamma = jax.random.uniform(kg, (c,), jnp.float32, 0.5, 1.5)
    beta = 0.1 * jax.random.normal(kb, (c,), jnp.float32)
    mean = 0.1 * jax.random.normal(km, (c,), jnp.float32)
    var = jax.random.uniform(kv, (c,), jnp.float32, 0.5, 1.5)
    return gamma, beta, mean, var


def _fold_bn(w, b, gamma, beta, mean, var, eps=1e-5):
    scale = gamma / jnp.sqrt(var + eps)
    return w * scale[None, :], (b - mean) * scale + beta


def make_params(key):
    keys = jax.random.split(key, 8)
    # mlp1: Conv(3,64)+BN+ReLU, Conv(64,64)
    w1, b1 = _conv1x1(keys[0], 3, 64)
    w1, b1 = _fold_bn(w1, b1, *_bn(keys[1], 64))
    w2, b2 = _conv1x1(keys[2], 64, 64)
    # mlp2: Conv(64,64)+BN+ReLU, Conv(64,128)+BN+ReLU, Conv(128,1024)
    w3, b3 = _conv1x1(keys[3], 64, 64)
    w3, b3 = _fold_bn(w3, b3, *_bn(keys[4], 64))
    w4, b4 = _conv1x1(keys[5], 64, 128)
    w4, b4 = _fold_bn(w4, b4, *_bn(keys[6], 128))
    w5, b5 = _conv1x1(keys[7], 128, 1024)
    # biases as [1, C] so they live as 2-D lane-dense VMEM tiles
    pack = lambda w, b: (w, b.reshape(1, -1))
    return (pack(w1, b1), pack(w2, b2), pack(w3, b3), pack(w4, b4), pack(w5, b5))


# ------------------------------ reference -------------------------------------

def reference(pointcloud, params):
    (w1, b1), (w2, b2), (w3, b3), (w4, b4), (w5, b5) = params

    def mm(x, w):  # same bf16-in / f32-accumulate arithmetic as the kernel
        return jnp.dot(x.astype(jnp.bfloat16), w.astype(jnp.bfloat16),
                       preferred_element_type=jnp.float32)

    h = jnp.maximum(mm(pointcloud, w1) + b1, 0.0)
    n64 = mm(h, w2) + b2
    h = jnp.maximum(mm(n64, w3) + b3, 0.0)
    h = jnp.maximum(mm(h, w4) + b4, 0.0)
    h = mm(h, w5) + b5
    gf = jnp.max(h, axis=1)
    return gf, n64


# -------------------------------- main -----------------------------------------

if __name__ == "__main__":
    key = jax.random.PRNGKey(0)
    k_x, k_p, k_x2 = jax.random.split(key, 3)
    params = make_params(k_p)

    # Test 1: small cloud; batch packing gives a single MXU call (TB=2, TN=16).
    B, N = 2, 16
    pc = jax.random.normal(k_x, (B, N, 3), jnp.float32)
    gf, n64 = jax.block_until_ready(pointnet_feat(pc, params))
    gf_r, n64_r = reference(pc, params)
    assert gf.shape == (B, 1024) and n64.shape == (B, N, 64)
    assert jnp.allclose(gf, gf_r, atol=1e-2, rtol=1e-2)
    assert jnp.allclose(n64, n64_r, atol=1e-2, rtol=1e-2)

    # Test 2: ragged N + multiple point tiles (exercises masking + the resident
    # gf accumulator across the "arbitrary" grid axis).
    B2, N2 = 3, 20
    pc2 = jax.random.normal(k_x2, (B2, N2, 3), jnp.float32)
    gf2, n642 = jax.block_until_ready(pointnet_feat(pc2, params, tile_n=8))
    gf2_r, n642_r = reference(pc2, params)
    assert gf2.shape == (B2, 1024) and n642.shape == (B2, N2, 64)
    assert jnp.allclose(gf2, gf2_r, atol=1e-2, rtol=1e-2)
    assert jnp.allclose(n642, n642_r, atol=1e-2, rtol=1e-2)

    print("KERNEL_OK")
</pallas_src>

<mosaic_0001>
module attributes {stable_mosaic.version = 11 : i64} {
  func.func @kernel(%arg0: i32, %arg1: i32, %arg2: memref<1x32x8xf32, #tpu.memory_space<vmem>>, %arg3: memref<8x64xbf16, #tpu.memory_space<vmem>>, %arg4: memref<1x64xf32, #tpu.memory_space<vmem>>, %arg5: memref<64x64xbf16, #tpu.memory_space<vmem>>, %arg6: memref<1x64xf32, #tpu.memory_space<vmem>>, %arg7: memref<64x64xbf16, #tpu.memory_space<vmem>>, %arg8: memref<1x64xf32, #tpu.memory_space<vmem>>, %arg9: memref<64x128xbf16, #tpu.memory_space<vmem>>, %arg10: memref<1x128xf32, #tpu.memory_space<vmem>>, %arg11: memref<128x1024xbf16, #tpu.memory_space<vmem>>, %arg12: memref<1x1024xf32, #tpu.memory_space<vmem>>, %arg13: memref<2x1024xf32, #tpu.memory_space<vmem>>, %arg14: memref<2x16x64xf32, #tpu.memory_space<vmem>>) attributes {dimension_semantics = [#tpu.dimension_semantics<parallel>, #tpu.dimension_semantics<arbitrary>], iteration_bounds = array<i64: 1, 1>, scalar_prefetch = 0 : i64, scratch_operands = 0 : i64, tpu.core_type = #tpu.core_type<tc>, window_params = [{transform_indices = @transform_0, window_bounds = array<i64: 1, 32, 8>}, {pipeline_mode = #tpu.pipeline_mode<synchronous>, transform_indices = @transform_1, window_bounds = array<i64: 8, 64>}, {pipeline_mode = #tpu.pipeline_mode<synchronous>, transform_indices = @transform_2, window_bounds = array<i64: 1, 64>}, {pipeline_mode = #tpu.pipeline_mode<synchronous>, transform_indices = @transform_3, window_bounds = array<i64: 64, 64>}, {pipeline_mode = #tpu.pipeline_mode<synchronous>, transform_indices = @transform_4, window_bounds = array<i64: 1, 64>}, {pipeline_mode = #tpu.pipeline_mode<synchronous>, transform_indices = @transform_5, window_bounds = array<i64: 64, 64>}, {pipeline_mode = #tpu.pipeline_mode<synchronous>, transform_indices = @transform_6, window_bounds = array<i64: 1, 64>}, {pipeline_mode = #tpu.pipeline_mode<synchronous>, transform_indices = @transform_7, window_bounds = array<i64: 64, 128>}, {pipeline_mode = #tpu.pipeline_mode<synchronous>, transform_indices = @transform_8, window_bounds = array<i64: 1, 128>}, {pipeline_mode = #tpu.pipeline_mode<synchronous>, transform_indices = @transform_9, window_bounds = array<i64: 128, 1024>}, {pipeline_mode = #tpu.pipeline_mode<synchronous>, transform_indices = @transform_10, window_bounds = array<i64: 1, 1024>}, {transform_indices = @transform_11, window_bounds = array<i64: 2, 1024>}, {transform_indices = @transform_12, window_bounds = array<i64: 2, 16, 64>}]} {
    %c0_i32 = arith.constant 0 : i32
    %0 = arith.cmpi eq, %arg1, %c0_i32 : i32
    %1 = arith.extui %0 : i1 to i32
    %c0_i32_0 = arith.constant 0 : i32
    %2 = arith.cmpi ne, %1, %c0_i32_0 : i32
    scf.if %2 {
      %cst_45 = arith.constant 0xFF800000 : f32
      %61 = vector.broadcast %cst_45 : f32 to vector<2x1024xf32>
      %c0_46 = arith.constant 0 : index
      %c0_47 = arith.constant 0 : index
      %62 = vector.load %arg13[%c0_46, %c0_47] : memref<2x1024xf32, #tpu.memory_space<vmem>>, vector<2x1024xf32>
      tpu.vector_store %arg13[%c0_46, %c0_47], %61 {strides = array<i32>} : memref<2x1024xf32, #tpu.memory_space<vmem>>, vector<2x1024xf32>,
    } else {
    }
    %c0 = arith.constant 0 : index
    %c0_1 = arith.constant 0 : index
    %c0_2 = arith.constant 0 : index
    %3 = vector.load %arg2[%c0, %c0_1, %c0_2] : memref<1x32x8xf32, #tpu.memory_space<vmem>>, vector<1x32x8xf32>
    %4 = vector.shape_cast %3 : vector<1x32x8xf32> to vector<32x8xf32>
    %5 = arith.truncf %4 : vector<32x8xf32> to vector<32x8xbf16>
    %c0_3 = arith.constant 0 : index
    %c0_4 = arith.constant 0 : index
    %6 = vector.load %arg3[%c0_3, %c0_4] : memref<8x64xbf16, #tpu.memory_space<vmem>>, vector<8x64xbf16>
    %cst = arith.constant dense<0.000000e+00> : vector<32x64xf32>
    %7 = tpu.matmul %5, %6, %cst {dimension_numbers = #tpu.dot_dimension_numbers<[1], [0], [0], [1], [0, 0, 1, 1], [], []>} : vector<32x8xbf16>, vector<8x64xbf16>, vector<32x64xf32> -> vector<32x64xf32>
    %c0_5 = arith.constant 0 : index
    %c0_6 = arith.constant 0 : index
    %8 = vector.load %arg4[%c0_5, %c0_6] : memref<1x64xf32, #tpu.memory_space<vmem>>, vector<1x64xf32>
    %9 = vector.broadcast %8 : vector<1x64xf32> to vector<32x64xf32>
    %10 = arith.addf %7, %9 : vector<32x64xf32>
    %cst_7 = arith.constant 0.000000e+00 : f32
    %11 = vector.broadcast %cst_7 : f32 to vector<32x64xf32>
    %12 = arith.maximumf %10, %11 : vector<32x64xf32>
    %13 = arith.truncf %12 : vector<32x64xf32> to vector<32x64xbf16>
    %c0_8 = arith.constant 0 : index
    %c0_9 = arith.constant 0 : index
    %14 = vector.load %arg5[%c0_8, %c0_9] : memref<64x64xbf16, #tpu.memory_space<vmem>>, vector<64x64xbf16>
    %cst_10 = arith.constant dense<0.000000e+00> : vector<32x64xf32>
    %15 = tpu.matmul %13, %14, %cst_10 {dimension_numbers = #tpu.dot_dimension_numbers<[1], [0], [0], [1], [0, 0, 1, 1], [], []>} : vector<32x64xbf16>, vector<64x64xbf16>, vector<32x64xf32> -> vector<32x64xf32>
    %c0_11 = arith.constant 0 : index
    %c0_12 = arith.constant 0 : index
    %16 = vector.load %arg6[%c0_11, %c0_12] : memref<1x64xf32, #tpu.memory_space<vmem>>, vector<1x64xf32>
    %17 = vector.broadcast %16 : vector<1x64xf32> to vector<32x64xf32>
    %18 = arith.addf %15, %17 : vector<32x64xf32>
    %19 = arith.truncf %18 : vector<32x64xf32> to vector<32x64xbf16>
    %c0_13 = arith.constant 0 : index
    %c0_14 = arith.constant 0 : index
    %20 = vector.load %arg7[%c0_13, %c0_14] : memref<64x64xbf16, #tpu.memory_space<vmem>>, vector<64x64xbf16>
    %cst_15 = arith.constant dense<0.000000e+00> : vector<32x64xf32>
    %21 = tpu.matmul %19, %20, %cst_15 {dimension_numbers = #tpu.dot_dimension_numbers<[1], [0], [0], [1], [0, 0, 1, 1], [], []>} : vector<32x64xbf16>, vector<64x64xbf16>, vector<32x64xf32> -> vector<32x64xf32>
    %c0_16 = arith.constant 0 : index
    %c0_17 = arith.constant 0 : index
    %22 = vector.load %arg8[%c0_16, %c0_17] : memref<1x64xf32, #tpu.memory_space<vmem>>, vector<1x64xf32>
    %23 = vector.broadcast %22 : vector<1x64xf32> to vector<32x64xf32>
    %24 = arith.addf %21, %23 : vector<32x64xf32>
    %cst_18 = arith.constant 0.000000e+00 : f32
    %25 = vector.broadcast %cst_18 : f32 to vector<32x64xf32>
    %26 = arith.maximumf %24, %25 : vector<32x64xf32>
    %27 = arith.truncf %26 : vector<32x64xf32> to vector<32x64xbf16>
    %c0_19 = arith.constant 0 : index
    %c0_20 = arith.constant 0 : index
    %28 = vector.load %arg9[%c0_19, %c0_20] : memref<64x128xbf16, #tpu.memory_space<vmem>>, vector<64x128xbf16>
    %cst_21 = arith.constant dense<0.000000e+00> : vector<32x128xf32>
    %29 = tpu.matmul %27, %28, %cst_21 {dimension_numbers = #tpu.dot_dimension_numbers<[1], [0], [0], [1], [0, 0, 1, 1], [], []>} : vector<32x64xbf16>, vector<64x128xbf16>, vector<32x128xf32> -> vector<32x128xf32>
    %c0_22 = arith.constant 0 : index
    %c0_23 = arith.constant 0 : index
    %30 = vector.load %arg10[%c0_22, %c0_23] : memref<1x128xf32, #tpu.memory_space<vmem>>, vector<1x128xf32>
    %31 = vector.broadcast %30 : vector<1x128xf32> to vector<32x128xf32>
    %32 = arith.addf %29, %31 : vector<32x128xf32>
    %cst_24 = arith.constant 0.000000e+00 : f32
    %33 = vector.broadcast %cst_24 : f32 to vector<32x128xf32>
    %34 = arith.maximumf %32, %33 : vector<32x128xf32>
    %35 = arith.truncf %34 : vector<32x128xf32> to vector<32x128xbf16>
    %c0_25 = arith.constant 0 : index
    %c0_26 = arith.constant 0 : index
    %36 = vector.load %arg11[%c0_25, %c0_26] : memref<128x1024xbf16, #tpu.memory_space<vmem>>, vector<128x1024xbf16>
    %cst_27 = arith.constant dense<0.000000e+00> : vector<32x1024xf32>
    %37 = tpu.matmul %35, %36, %cst_27 {dimension_numbers = #tpu.dot_dimension_numbers<[1], [0], [0], [1], [0, 0, 1, 1], [], []>} : vector<32x128xbf16>, vector<128x1024xbf16>, vector<32x1024xf32> -> vector<32x1024xf32>
    %38 = vector.extract_strided_slice %18 {offsets = [0, 0], sizes = [16, 64], strides = [1, 1]} : vector<32x64xf32> to vector<16x64xf32>
    %c0_28 = arith.constant 0 : index
    %c0_29 = arith.constant 0 : index
    %c0_30 = arith.constant 0 : index
    %39 = vector.load %arg14[%c0_28, %c0_29, %c0_30] : memref<2x16x64xf32, #tpu.memory_space<vmem>>, vector<1x16x64xf32>
    %40 = vector.shape_cast %39 : vector<1x16x64xf32> to vector<16x64xf32>
    %41 = vector.shape_cast %38 : vector<16x64xf32> to vector<1x16x64xf32>
    tpu.vector_store %arg14[%c0_28, %c0_29, %c0_30], %41 {strides = array<i32>} : memref<2x16x64xf32, #tpu.memory_space<vmem>>, vector<1x16x64xf32>,
    %42 = vector.extract_strided_slice %37 {offsets = [0, 0], sizes = [16, 1024], strides = [1, 1]} : vector<32x1024xf32> to vector<16x1024xf32>
    %cst_31 = arith.constant dense<0xFF800000> : vector<1024xf32>
    %43 = vector.multi_reduction <maximumf>, %42, %cst_31 [0] : vector<16x1024xf32> to vector<1024xf32>
    %44 = vector.shape_cast %43 : vector<1024xf32> to vector<1x1024xf32>
    %c0_32 = arith.constant 0 : index
    %c0_33 = arith.constant 0 : index
    %45 = vector.load %arg13[%c0_32, %c0_33] : memref<2x1024xf32, #tpu.memory_space<vmem>>, vector<1x1024xf32>
    %46 = arith.maximumf %45, %44 : vector<1x1024xf32>
    %c0_34 = arith.constant 0 : index
    %c0_35 = arith.constant 0 : index
    %47 = vector.load %arg13[%c0_34, %c0_35] : memref<2x1024xf32, #tpu.memory_space<vmem>>, vector<1x1024xf32>
    tpu.vector_store %arg13[%c0_34, %c0_35], %46 {strides = array<i32>} : memref<2x1024xf32, #tpu.memory_space<vmem>>, vector<1x1024xf32>,
    %48 = vector.extract_strided_slice %18 {offsets = [16, 0], sizes = [16, 64], strides = [1, 1]} : vector<32x64xf32> to vector<16x64xf32>
    %c1 = arith.constant 1 : index
    %c0_36 = arith.constant 0 : index
    %c0_37 = arith.constant 0 : index
    %49 = vector.load %arg14[%c1, %c0_36, %c0_37] : memref<2x16x64xf32, #tpu.memory_space<vmem>>, vector<1x16x64xf32>
    %50 = vector.shape_cast %49 : vector<1x16x64xf32> to vector<16x64xf32>
    %51 = vector.shape_cast %48 : vector<16x64xf32> to vector<1x16x64xf32>
    tpu.vector_store %arg14[%c1, %c0_36, %c0_37], %51 {strides = array<i32>} : memref<2x16x64xf32, #tpu.memory_space<vmem>>, vector<1x16x64xf32>,
    %52 = vector.extract_strided_slice %37 {offsets = [16, 0], sizes = [16, 1024], strides = [1, 1]} : vector<32x1024xf32> to vector<16x1024xf32>
    %cst_38 = arith.constant dense<0xFF800000> : vector<1024xf32>
    %53 = vector.multi_reduction <maximumf>, %52, %cst_38 [0] : vector<16x1024xf32> to vector<1024xf32>
    %54 = vector.shape_cast %53 : vector<1024xf32> to vector<1x1024xf32>
    %c1_39 = arith.constant 1 : index
    %c0_40 = arith.constant 0 : index
    %55 = vector.load %arg13[%c1_39, %c0_40] : memref<2x1024xf32, #tpu.memory_space<vmem>>, vector<1x1024xf32>
    %56 = arith.maximumf %55, %54 : vector<1x1024xf32>
    %c1_41 = arith.constant 1 : index
    %c0_42 = arith.constant 0 : index
    %57 = vector.load %arg13[%c1_41, %c0_42] : memref<2x1024xf32, #tpu.memory_space<vmem>>, vector<1x1024xf32>
    tpu.vector_store %arg13[%c1_41, %c0_42], %56 {strides = array<i32>} : memref<2x1024xf32, #tpu.memory_space<vmem>>, vector<1x1024xf32>,
    %c0_i32_43 = arith.constant 0 : i32
    %58 = arith.cmpi eq, %arg1, %c0_i32_43 : i32
    %59 = arith.extui %58 : i1 to i32
    %c0_i32_44 = arith.constant 0 : i32
    %60 = arith.cmpi ne, %59, %c0_i32_44 : i32
    scf.if %60 {
      %c0_45 = arith.constant 0 : index
      %c0_46 = arith.constant 0 : index
      %61 = vector.load %arg13[%c0_45, %c0_46] : memref<2x1024xf32, #tpu.memory_space<vmem>>, vector<2x1024xf32>
      %c0_47 = arith.constant 0 : index
      %c0_48 = arith.constant 0 : index
      %62 = vector.load %arg12[%c0_47, %c0_48] : memref<1x1024xf32, #tpu.memory_space<vmem>>, vector<1x1024xf32>
      %63 = vector.broadcast %62 : vector<1x1024xf32> to vector<2x1024xf32>
      %64 = arith.addf %61, %63 : vector<2x1024xf32>
      %c0_49 = arith.constant 0 : index
      %c0_50 = arith.constant 0 : index
      %65 = vector.load %arg13[%c0_49, %c0_50] : memref<2x1024xf32, #tpu.memory_space<vmem>>, vector<2x1024xf32>
      tpu.vector_store %arg13[%c0_49, %c0_50], %64 {strides = array<i32>} : memref<2x1024xf32, #tpu.memory_space<vmem>>, vector<2x1024xf32>,
    } else {
    }
    return
  }
  func.func @transform_0(%arg0: i32, %arg1: i32) -> (i32, i32, i32) {
    %c1_i32 = arith.constant 1 : i32
    %0 = arith.muli %arg0, %c1_i32 : i32
    %1 = arith.addi %0, %arg1 : i32
    %c0_i32 = arith.constant 0 : i32
    %c0_i32_0 = arith.constant 0 : i32
    %c0_i32_1 = arith.constant 0 : i32
    return %1, %c0_i32, %c0_i32_0 : i32, i32, i32
  }
  func.func @transform_1(%arg0: i32, %arg1: i32) -> (i32, i32) {
    %c0_i32 = arith.constant 0 : i32
    %c0_i32_0 = arith.constant 0 : i32
    %c0_i32_1 = arith.constant 0 : i32
    return %c0_i32, %c0_i32_0 : i32, i32
  }
  func.func @transform_2(%arg0: i32, %arg1: i32) -> (i32, i32) {
    %c0_i32 = arith.constant 0 : i32
    %c0_i32_0 = arith.constant 0 : i32
    %c0_i32_1 = arith.constant 0 : i32
    return %c0_i32, %c0_i32_0 : i32, i32
  }
  func.func @transform_3(%arg0: i32, %arg1: i32) -> (i32, i32) {
    %c0_i32 = arith.constant 0 : i32
    %c0_i32_0 = arith.constant 0 : i32
    %c0_i32_1 = arith.constant 0 : i32
    return %c0_i32, %c0_i32_0 : i32, i32
  }
  func.func @transform_4(%arg0: i32, %arg1: i32) -> (i32, i32) {
    %c0_i32 = arith.constant 0 : i32
    %c0_i32_0 = arith.constant 0 : i32
    %c0_i32_1 = arith.constant 0 : i32
    return %c0_i32, %c0_i32_0 : i32, i32
  }
  func.func @transform_5(%arg0: i32, %arg1: i32) -> (i32, i32) {
    %c0_i32 = arith.constant 0 : i32
    %c0_i32_0 = arith.constant 0 : i32
    %c0_i32_1 = arith.constant 0 : i32
    return %c0_i32, %c0_i32_0 : i32, i32
  }
  func.func @transform_6(%arg0: i32, %arg1: i32) -> (i32, i32) {
    %c0_i32 = arith.constant 0 : i32
    %c0_i32_0 = arith.constant 0 : i32
    %c0_i32_1 = arith.constant 0 : i32
    return %c0_i32, %c0_i32_0 : i32, i32
  }
  func.func @transform_7(%arg0: i32, %arg1: i32) -> (i32, i32) {
    %c0_i32 = arith.constant 0 : i32
    %c0_i32_0 = arith.constant 0 : i32
    %c0_i32_1 = arith.constant 0 : i32
    return %c0_i32, %c0_i32_0 : i32, i32
  }
  func.func @transform_8(%arg0: i32, %arg1: i32) -> (i32, i32) {
    %c0_i32 = arith.constant 0 : i32
    %c0_i32_0 = arith.constant 0 : i32
    %c0_i32_1 = arith.constant 0 : i32
    return %c0_i32, %c0_i32_0 : i32, i32
  }
  func.func @transform_9(%arg0: i32, %arg1: i32) -> (i32, i32) {
    %c0_i32 = arith.constant 0 : i32
    %c0_i32_0 = arith.constant 0 : i32
    %c0_i32_1 = arith.constant 0 : i32
    return %c0_i32, %c0_i32_0 : i32, i32
  }
  func.func @transform_10(%arg0: i32, %arg1: i32) -> (i32, i32) {
    %c0_i32 = arith.constant 0 : i32
    %c0_i32_0 = arith.constant 0 : i32
    %c0_i32_1 = arith.constant 0 : i32
    return %c0_i32, %c0_i32_0 : i32, i32
  }
  func.func @transform_11(%arg0: i32, %arg1: i32) -> (i32, i32) {
    %c0_i32 = arith.constant 0 : i32
    %c0_i32_0 = arith.constant 0 : i32
    return %arg0, %c0_i32 : i32, i32
  }
  func.func @transform_12(%arg0: i32, %arg1: i32) -> (i32, i32, i32) {
    %c0_i32 = arith.constant 0 : i32
    %c0_i32_0 = arith.constant 0 : i32
    return %arg0, %arg1, %c0_i32 : i32, i32, i32
  }
}

</mosaic_0001>

<llo_original>
// kernel: tpu_custom_call.1
$region0: #{tpu_custom_call.1}
  #allocation0 [shape = 'u32[]', space=smem, size = 0x4, offset = 0x4, fixed_abs, tag = 'smem constant byte address 0x4 - core index']
  #allocation1 [shape = 'u32[72,128]{1,0:T(1,128)}', space=vmem, size = 0x9000, scoped, tag = 'internal scratch']
  %s0 = inlined_call_operand.vmem [shape: f32[1,32,8], index: 0, kind: input, shape index: {}]
  %s1 = inlined_call_operand.hbm [shape: bf16[8,64], index: 1, kind: input, shape index: {}]
  %s2 = inlined_call_operand.vmem [shape: f32[1,64], index: 2, kind: input, shape index: {}]
  %s3 = inlined_call_operand.vmem [shape: bf16[64,64], index: 3, kind: input, shape index: {}]
  %s4 = inlined_call_operand.vmem [shape: f32[1,64], index: 4, kind: input, shape index: {}]
  %s5 = inlined_call_operand.hbm [shape: bf16[64,64], index: 5, kind: input, shape index: {}]
  %s6 = inlined_call_operand.vmem [shape: f32[1,64], index: 6, kind: input, shape index: {}]
  %s7 = inlined_call_operand.hbm [shape: bf16[64,128], index: 7, kind: input, shape index: {}]
  %s8 = inlined_call_operand.vmem [shape: f32[1,128], index: 8, kind: input, shape index: {}]
  %s9 = inlined_call_operand.hbm [shape: bf16[128,1024], index: 9, kind: input, shape index: {}]
  %s10 = inlined_call_operand.vmem [shape: f32[1,1024], index: 10, kind: input, shape index: {}]
  %s11 = inlined_call_operand.hbm [shape: f32[2,1024], index: 11, kind: output, shape index: {0}]
  %s12 = inlined_call_operand.hbm [shape: f32[2,16,64], index: 12, kind: output, shape index: {1}]
  %13 = xla_tuple %s11, %s12
  %s14 = sld [smem:[#allocation0]]
  $region86: #{tpu_custom_call.1} parent=0
    _
  %s16 = ssub.s32 1, %s14
  %s17 = scalar_select 0, %s16, %s14
  $region1: #{tpu_custom_call.1} parent=0
    #allocation2 [shape = 'u8[2048]{0}', space=vmem, size = 0x800, scoped, tag = 'input window, operand 1, single buffered']
    #allocation3 [shape = 's32[1]{0}', space=sflag, size = 0x4, scoped, tag = 'scoped memory for tpu_custom_call.1']
    #allocation4 [shape = 's32[1]{0}', space=sflag, size = 0x4, scoped, tag = 'scoped memory for tpu_custom_call.1']
    #allocation5 [shape = 'u8[16384]{0}', space=vmem, size = 0x4000, scoped, tag = 'input window, operand 5, single buffered']
    #allocation6 [shape = 's32[1]{0}', space=sflag, size = 0x4, scoped, tag = 'scoped memory for tpu_custom_call.1']
    #allocation7 [shape = 'u8[16384]{0}', space=vmem, size = 0x4000, scoped, tag = 'input window, operand 7, single buffered']
    #allocation8 [shape = 'u8[262144]{0}', space=vmem, size = 0x40000, scoped, tag = 'input window, operand 9, single buffered']
    #allocation9 [shape = 's32[1]{0}', space=sflag, size = 0x4, scoped, tag = 'scoped memory for tpu_custom_call.1']
    #allocation10 [shape = 'u8[8192]{0}', space=vmem, size = 0x2000, scoped, tag = 'output window, operand 0, single buffered']
    #allocation11 [shape = 'u8[16384]{0}', space=vmem, size = 0x4000, scoped, tag = 'output window, operand 1, single buffered']
    #allocation12 [shape = 's32[1]{0}', space=sflag, size = 0x4, scoped, tag = 'scoped memory for tpu_custom_call.1']
    %18 = vsyncpa [#allocation3], 0
    %19 = vsyncpa [#allocation6], 0
    %20 = vsyncpa [#allocation9], 0
    %21 = vsyncpa [#allocation4], 0
    %22 = vsyncpa [#allocation12], 0
    // Predicated region
    $region2: #{tpu_custom_call.1} parent=1 // pred_check
      _
    $region3: #{tpu_custom_call.1} parent=1 // pred_check_branch
      %24 = sbr.rel (0) target = $region5
    $region4: #{tpu_custom_call.1} parent=1 // pred_region
      %s25 = sadd.s32 0, 0
      %p26 = scmp.lt.s32.totalorder %s25, 0
      %s27 = scalar_select %p26, %s25, 0
      %s28 = smul.addr %s27, 4
      %s29 = smul.addr %s28, 8
      %s30 = scalar_lea.vmem %s0, %s29
      %s31 = sadd.s32 0, 0
    $region5: #{tpu_custom_call.1} parent=1 // pred_fallthru
      _
    // Predicated region
    $region6: #{tpu_custom_call.1} parent=1 // pred_check
      _
    $region7: #{tpu_custom_call.1} parent=1 // pred_check_branch
      %33 = sbr.rel (0) target = $region9
    $region8: #{tpu_custom_call.1} parent=1 // pred_region
      %35 = vsyncadd [#allocation3], 0
      %s37 = sshll.u32 %s1, 4
      %s38 = int_to_ptr.hbm [resolvable:$true] %s37
      %s39 = sshll.u32 [#allocation2], 4
      %s40 = int_to_ptr.vmem [resolvable:$true] %s39
      %42 = dma.hbm_to_vmem [thread:$0]  %s38, 64, %s40, [#allocation3]
    $region9: #{tpu_custom_call.1} parent=1 // pred_fallthru
      _
    // Predicated region
    $region10: #{tpu_custom_call.1} parent=1 // pred_check
      _
    $region11: #{tpu_custom_call.1} parent=1 // pred_check_branch
      %44 = sbr.rel (0) target = $region13
    $region12: #{tpu_custom_call.1} parent=1 // pred_region
      _
    $region13: #{tpu_custom_call.1} parent=1 // pred_fallthru
      _
    // Predicated region
    $region14: #{tpu_custom_call.1} parent=1 // pred_check
      _
    $region15: #{tpu_custom_call.1} parent=1 // pred_check_branch
      %46 = sbr.rel (0) target = $region17
    $region16: #{tpu_custom_call.1} parent=1 // pred_region
      _
    $region17: #{tpu_custom_call.1} parent=1 // pred_fallthru
      _
    // Predicated region
    $region18: #{tpu_custom_call.1} parent=1 // pred_check
      _
    $region19: #{tpu_custom_call.1} parent=1 // pred_check_branch
      %48 = sbr.rel (0) target = $region21
    $region20: #{tpu_custom_call.1} parent=1 // pred_region
      _
    $region21: #{tpu_custom_call.1} parent=1 // pred_fallthru
      _
    // Predicated region
    $region22: #{tpu_custom_call.1} parent=1 // pred_check
      _
    $region23: #{tpu_custom_call.1} parent=1 // pred_check_branch
      %50 = sbr.rel (0) target = $region25
    $region24: #{tpu_custom_call.1} parent=1 // pred_region
      %52 = vsyncadd [#allocation6], 0
      %s53 = sshll.u32 %s5, 4
      %s54 = int_to_ptr.hbm [resolvable:$true] %s53
      %s55 = sshll.u32 [#allocation5], 4
      %s56 = int_to_ptr.vmem [resolvable:$true] %s55
      %61 = dma.hbm_to_vmem [thread:$0]  %s54, 512, %s56, [#allocation6], 64, 64, 4
    $region25: #{tpu_custom_call.1} parent=1 // pred_fallthru
      _
    // Predicated region
    $region26: #{tpu_custom_call.1} parent=1 // pred_check
      _
    $region27: #{tpu_custom_call.1} parent=1 // pred_check_branch
      %63 = sbr.rel (0) target = $region29
    $region28: #{tpu_custom_call.1} parent=1 // pred_region
      _
    $region29: #{tpu_custom_call.1} parent=1 // pred_fallthru
      _
    // Predicated region
    $region30: #{tpu_custom_call.1} parent=1 // pred_check
      _
    $region31: #{tpu_custom_call.1} parent=1 // pred_check_branch
      %65 = sbr.rel (0) target = $region33
    $region32: #{tpu_custom_call.1} parent=1 // pred_region
      %67 = vsyncadd [#allocation6], 0
      %s68 = sshll.u32 %s7, 4
      %s69 = int_to_ptr.hbm [resolvable:$true] %s68
      %s70 = sshll.u32 [#allocation7], 4
      %s71 = int_to_ptr.vmem [resolvable:$true] %s70
      %76 = dma.hbm_to_vmem [thread:$0]  %s69, 512, %s71, [#allocation6], 64, 64, 4
    $region33: #{tpu_custom_call.1} parent=1 // pred_fallthru
      _
    // Predicated region
    $region34: #{tpu_custom_call.1} parent=1 // pred_check
      _
    $region35: #{tpu_custom_call.1} parent=1 // pred_check_branch
      %78 = sbr.rel (0) target = $region37
    $region36: #{tpu_custom_call.1} parent=1 // pred_region
      _
    $region37: #{tpu_custom_call.1} parent=1 // pred_fallthru
      _
    // Predicated region
    $region38: #{tpu_custom_call.1} parent=1 // pred_check
      _
    $region39: #{tpu_custom_call.1} parent=1 // pred_check_branch
      %80 = sbr.rel (0) target = $region41
    $region40: #{tpu_custom_call.1} parent=1 // pred_region
      %82 = vsyncadd [#allocation9], 0
      %s83 = sshll.u32 %s9, 4
      %s84 = int_to_ptr.hbm [resolvable:$true] %s83
      %s85 = sshll.u32 [#allocation8], 4
      %s86 = int_to_ptr.vmem [resolvable:$true] %s85
      %91 = dma.hbm_to_vmem [thread:$0]  %s84, 8192, %s86, [#allocation9], 512, 512, 32
    $region41: #{tpu_custom_call.1} parent=1 // pred_fallthru
      _
    // Predicated region
    $region42: #{tpu_custom_call.1} parent=1 // pred_check
      _
    $region43: #{tpu_custom_call.1} parent=1 // pred_check_branch
      %93 = sbr.rel (0) target = $region45
    $region44: #{tpu_custom_call.1} parent=1 // pred_region
      _
    $region45: #{tpu_custom_call.1} parent=1 // pred_fallthru
      _
    // Predicated region
    $region46: #{tpu_custom_call.1} parent=1 // pred_check
      _
    $region47: #{tpu_custom_call.1} parent=1 // pred_check_branch
      %95 = sbr.rel (0) target = $region49
    $region48: #{tpu_custom_call.1} parent=1 // pred_region
      %97 = dma.done [#allocation3], 64
    $region49: #{tpu_custom_call.1} parent=1 // pred_fallthru
      _
    // Predicated region
    $region50: #{tpu_custom_call.1} parent=1 // pred_check
      _
    $region51: #{tpu_custom_call.1} parent=1 // pred_check_branch
      %99 = sbr.rel (0) target = $region53
    $region52: #{tpu_custom_call.1} parent=1 // pred_region
      %101 = dma.done [#allocation6], 512
    $region53: #{tpu_custom_call.1} parent=1 // pred_fallthru
      _
    // Predicated region
    $region54: #{tpu_custom_call.1} parent=1 // pred_check
      _
    $region55: #{tpu_custom_call.1} parent=1 // pred_check_branch
      %103 = sbr.rel (0) target = $region57
    $region56: #{tpu_custom_call.1} parent=1 // pred_region
      %105 = dma.done [#allocation6], 512
    $region57: #{tpu_custom_call.1} parent=1 // pred_fallthru
      _
    // Predicated region
    $region58: #{tpu_custom_call.1} parent=1 // pred_check
      _
    $region59: #{tpu_custom_call.1} parent=1 // pred_check_branch
      %107 = sbr.rel (0) target = $region61
    $region60: #{tpu_custom_call.1} parent=1 // pred_region
      %109 = dma.done [#allocation9], 8192
    $region61: #{tpu_custom_call.1} parent=1 // pred_fallthru
      _
    %s110 = sadd.s32 0, 0
    %p111 = scmp.lt.s32.totalorder %s110, 0
    %s112 = scalar_select %p111, %s110, 0
    %s113 = smul.addr %s112, 4
    %s114 = smul.addr %s113, 8
    %s115 = scalar_lea.vmem %s0, %s114
    %s116 = sadd.s32 0, 0
    %p117 = scmp.lt.s32.totalorder %s116, 0
    %s118 = scalar_select %p117, %s116, 0
    %s119 = smul.addr %s118, 4
    %s120 = smul.addr %s119, 8
    %s121 = scalar_lea.vmem %s0, %s120
    %s122 = sadd.s32 0, 0
    %p124 = scmp.eq.s32.totalorder 0, 0
    // Predicated region
    $region62: #{tpu_custom_call.1} parent=1 // pred_check
      %p125 = pneg %p124
    $region63: #{tpu_custom_call.1} parent=1 // pred_check_branch
      %127 = sbr.rel (%p125) target = $region65
    $region64: #{tpu_custom_call.1} parent=1 // pred_region
      %128 = vst [vmem:[#allocation10] sm:$0xff] -inf
      %129 = vst [vmem:[#allocation10 + $0x8] sm:$0xff] -inf
    $region65: #{tpu_custom_call.1} parent=1 // pred_fallthru
      _
    %v130 = vld [vmem:[%s121] sm:$0xff]
    %v131 = vld [vmem:[%s121 + $0x8] sm:$0xff]
    %v132 = vld [vmem:[%s121 + $0x10] sm:$0xff]
    %v133 = vld [vmem:[%s121 + $0x18] sm:$0xff]
    %v134 = vpack.c.bf16 %v131, %v130
    %v135 = vpack.c.bf16 %v133, %v132
    %v136 = vld [vmem:[#allocation2] sm:$0xf]
    %v137 = vld [vmem:[%s2] sm:$0x1]
    %v139 = vperm.slane %v137, 0
    %vm141 = vcmask 64512
    %v143 = vsel %vm141, %v134, 0
    %v146 = vsel %vm141, %v135, 0
    %vm148 = vcmask 1043456
    %v150 = vsel %vm148, %v136, 0
    %152 = vmatpush.bf16.msra.mxu0 0
    %153 = vmatpush.bf16.msra.mxu0 0
    %154 = vmatpush.bf16.msra.mxu0 0
    %155 = vmatpush.bf16.msra.mxu0 0
    %156 = vmatpush.bf16.msra.mxu0 0
    %157 = vmatpush.bf16.msra.mxu0 0
    %158 = vmatpush.bf16.msra.mxu0 0
    %159 = vmatpush.bf16.msra.mxu0 %v150
    %160 = vmatmul.bf16.gmra.mxu0 %v143
    %v161 = vpop.f32.mrf.mxu0
    %v162 = vadd.f32 %v139, %v161
    %v163 = vpop.f32.mrf.mxu0
    %v164 = vadd.f32 %v139, %v163
    %165 = vmatmul.bf16.gmra.mxu0 %v146
    %v166 = vpop.f32.mrf.mxu0
    %v167 = vadd.f32 %v139, %v166
    %v168 = vpop.f32.mrf.mxu0
    %v169 = vadd.f32 %v139, %v168
    %170 = vdwg.mxu0
    %v171 = vmax.f32 %v162, 0.0
    %v172 = vmax.f32 %v164, 0.0
    %v173 = vmax.f32 %v167, 0.0
    %v174 = vmax.f32 %v169, 0.0
    %v175 = vpack.c.bf16 %v172, %v171
    %v176 = vpack.c.bf16 %v174, %v173
    %v177 = vld [vmem:[%s3] sm:$0xf]
    %v178 = vld [vmem:[%s3 + $0x4] sm:$0xf]
    %v179 = vld [vmem:[%s3 + $0x8] sm:$0xf]
    %v180 = vld [vmem:[%s3 + $0xc] sm:$0xf]
    %v181 = vld [vmem:[%s3 + $0x10] sm:$0xf]
    %v182 = vld [vmem:[%s3 + $0x14] sm:$0xf]
    %v183 = vld [vmem:[%s3 + $0x18] sm:$0xf]
    %v184 = vld [vmem:[%s3 + $0x1c] sm:$0xf]
    %v185 = vld [vmem:[%s4] sm:$0x1]
    %v187 = vperm.slane %v185, 0
    %v197 = vunpack.c.l.b16 %v177
    %v198 = vunpack.c.l.b16 %v178
    %v199 = vunpack.c.l.b16 %v179
    %v200 = vunpack.c.l.b16 %v180
    %v201 = vunpack.c.l.b16 %v181
    %v202 = vunpack.c.l.b16 %v182
    %v203 = vunpack.c.l.b16 %v183
    %v204 = vunpack.c.l.b16 %v184
    %v205 = vpack.c.b16 %v198, %v197
    %v206 = vpack.c.b16 %v200, %v199
    %v207 = vpack.c.b16 %v202, %v201
    %v208 = vpack.c.b16 %v204, %v203
    %vm213 = vcmask 523264
    %v215 = vsel %vm213, %v175, 0
    %v218 = vsel %vm213, %v176, 0
    %220 = vmatpush.bf16.msra.mxu0 0
    %221 = vmatpush.bf16.msra.mxu0 0
    %222 = vmatpush.bf16.msra.mxu0 0
    %223 = vmatpush.bf16.msra.mxu0 0
    %224 = vmatpush.bf16.msra.mxu0 %v208
    %225 = vmatpush.bf16.msra.mxu0 %v207
    %226 = vmatpush.bf16.msra.mxu0 %v206
    %227 = vmatpush.bf16.msra.mxu0 %v205
    %228 = vmatmul.bf16.gmra.mxu0 %v215
    %v229 = vpop.f32.mrf.mxu0
    %v230 = vadd.f32 %v187, %v229
    %v231 = vpop.f32.mrf.mxu0
    %v232 = vadd.f32 %v187, %v231
    %233 = vmatmul.bf16.gmra.mxu0 %v218
    %v234 = vpop.f32.mrf.mxu0
    %v235 = vadd.f32 %v187, %v234
    %v236 = vpop.f32.mrf.mxu0
    %v237 = vadd.f32 %v187, %v236
    %238 = vdwg.mxu0
    %v239 = vpack.c.bf16 %v232, %v230
    %v240 = vpack.c.bf16 %v237, %v235
    %v241 = vld [vmem:[#allocation5] sm:$0xf]
    %v242 = vld [vmem:[#allocation5 + $0x4] sm:$0xf]
    %v243 = vld [vmem:[#allocation5 + $0x8] sm:$0xf]
    %v244 = vld [vmem:[#allocation5 + $0xc] sm:$0xf]
    %v245 = vld [vmem:[#allocation5 + $0x10] sm:$0xf]
    %v246 = vld [vmem:[#allocation5 + $0x14] sm:$0xf]
    %v247 = vld [vmem:[#allocation5 + $0x18] sm:$0xf]
    %v248 = vld [vmem:[#allocation5 + $0x1c] sm:$0xf]
    %v249 = vld [vmem:[%s6] sm:$0x1]
    %v251 = vperm.slane %v249, 0
    %v261 = vunpack.c.l.b16 %v241
    %v262 = vunpack.c.l.b16 %v242
    %v263 = vunpack.c.l.b16 %v243
    %v264 = vunpack.c.l.b16 %v244
    %v265 = vunpack.c.l.b16 %v245
    %v266 = vunpack.c.l.b16 %v246
    %v267 = vunpack.c.l.b16 %v247
    %v268 = vunpack.c.l.b16 %v248
    %v269 = vpack.c.b16 %v262, %v261
    %v270 = vpack.c.b16 %v264, %v263
    %v271 = vpack.c.b16 %v266, %v265
    %v272 = vpack.c.b16 %v268, %v267
    %v278 = vsel %vm213, %v239, 0
    %v281 = vsel %vm213, %v240, 0
    %283 = vmatpush.bf16.msra.mxu0 0
    %284 = vmatpush.bf16.msra.mxu0 0
    %285 = vmatpush.bf16.msra.mxu0 0
    %286 = vmatpush.bf16.msra.mxu0 0
    %287 = vmatpush.bf16.msra.mxu0 %v272
    %288 = vmatpush.bf16.msra.mxu0 %v271
    %289 = vmatpush.bf16.msra.mxu0 %v270
    %290 = vmatpush.bf16.msra.mxu0 %v269
    %291 = vmatmul.bf16.gmra.mxu0 %v278
    %v292 = vpop.f32.mrf.mxu0
    %v293 = vadd.f32 %v251, %v292
    %v294 = vpop.f32.mrf.mxu0
    %v295 = vadd.f32 %v251, %v294
    %296 = vmatmul.bf16.gmra.mxu0 %v281
    %v297 = vpop.f32.mrf.mxu0
    %v298 = vadd.f32 %v251, %v297
    %v299 = vpop.f32.mrf.mxu0
    %v300 = vadd.f32 %v251, %v299
    %301 = vdwg.mxu0
    %v302 = vmax.f32 %v293, 0.0
    %v303 = vmax.f32 %v295, 0.0
    %v304 = vmax.f32 %v298, 0.0
    %v305 = vmax.f32 %v300, 0.0
    %v306 = vpack.c.bf16 %v303, %v302
    %v307 = vpack.c.bf16 %v305, %v304
    %v308 = vld [vmem:[#allocation7] sm:$0xf]
    %v309 = vld [vmem:[#allocation7 + $0x4] sm:$0xf]
    %v310 = vld [vmem:[#allocation7 + $0x8] sm:$0xf]
    %v311 = vld [vmem:[#allocation7 + $0xc] sm:$0xf]
    %v312 = vld [vmem:[#allocation7 + $0x10] sm:$0xf]
    %v313 = vld [vmem:[#allocation7 + $0x14] sm:$0xf]
    %v314 = vld [vmem:[#allocation7 + $0x18] sm:$0xf]
    %v315 = vld [vmem:[#allocation7 + $0x1c] sm:$0xf]
    %v316 = vld [vmem:[%s8] sm:$0x1]
    %v318 = vperm.slane %v316, 0
    %v328 = vunpack.c.l.b16 %v308
    %v329 = vunpack.c.l.b16 %v309
    %v330 = vunpack.c.l.b16 %v310
    %v331 = vunpack.c.l.b16 %v311
    %v332 = vunpack.c.l.b16 %v312
    %v333 = vunpack.c.l.b16 %v313
    %v334 = vunpack.c.l.b16 %v314
    %v335 = vunpack.c.l.b16 %v315
    %v336 = vpack.c.b16 %v329, %v328
    %v337 = vpack.c.b16 %v331, %v330
    %v338 = vpack.c.b16 %v333, %v332
    %v339 = vpack.c.b16 %v335, %v334
    %v345 = vsel %vm213, %v306, 0
    %v348 = vsel %vm213, %v307, 0
    %350 = vmatpush.bf16.msra.mxu0 0
    %351 = vmatpush.bf16.msra.mxu0 0
    %352 = vmatpush.bf16.msra.mxu0 0
    %353 = vmatpush.bf16.msra.mxu0 0
    %354 = vmatpush.bf16.msra.mxu0 %v339
    %355 = vmatpush.bf16.msra.mxu0 %v338
    %356 = vmatpush.bf16.msra.mxu0 %v337
    %357 = vmatpush.bf16.msra.mxu0 %v336
    %358 = vmatmul.bf16.gmra.mxu0 %v345
    %v359 = vpop.f32.mrf.mxu0
    %v360 = vadd.f32 %v318, %v359
    %v361 = vpop.f32.mrf.mxu0
    %v362 = vadd.f32 %v318, %v361
    %363 = vmatmul.bf16.gmra.mxu0 %v348
    %v364 = vpop.f32.mrf.mxu0
    %v365 = vadd.f32 %v318, %v364
    %v366 = vpop.f32.mrf.mxu0
    %v367 = vadd.f32 %v318, %v366
    %368 = vdwg.mxu0
    %v369 = vmax.f32 %v360, 0.0
    %v370 = vmax.f32 %v362, 0.0
    %v371 = vmax.f32 %v365, 0.0
    %v372 = vmax.f32 %v367, 0.0
    %v373 = vpack.c.bf16 %v370, %v369
    %v374 = vpack.c.bf16 %v372, %v371
    %v375 = vld [vmem:[#allocation8] sm:$0xff]
    %v376 = vld [vmem:[#allocation8 + $0x8] sm:$0xff]
    %v377 = vld [vmem:[#allocation8 + $0x10] sm:$0xff]
    %v378 = vld [vmem:[#allocation8 + $0x18] sm:$0xff]
    %v379 = vld [vmem:[#allocation8 + $0x20] sm:$0xff]
    %v380 = vld [vmem:[#allocation8 + $0x28] sm:$0xff]
    %v381 = vld [vmem:[#allocation8 + $0x30] sm:$0xff]
    %v382 = vld [vmem:[#allocation8 + $0x38] sm:$0xff]
    %v383 = vld [vmem:[#allocation8 + $0x40] sm:$0xff]
    %v384 = vld [vmem:[#allocation8 + $0x48] sm:$0xff]
    %v385 = vld [vmem:[#allocation8 + $0x50] sm:$0xff]
    %v386 = vld [vmem:[#allocation8 + $0x58] sm:$0xff]
    %v387 = vld [vmem:[#allocation8 + $0x60] sm:$0xff]
    %v388 = vld [vmem:[#allocation8 + $0x68] sm:$0xff]
    %v389 = vld [vmem:[#allocation8 + $0x70] sm:$0xff]
    %v390 = vld [vmem:[#allocation8 + $0x78] sm:$0xff]
    %v391 = vld [vmem:[#allocation8 + $0x80] sm:$0xff]
    %v392 = vld [vmem:[#allocation8 + $0x88] sm:$0xff]
    %v393 = vld [vmem:[#allocation8 + $0x90] sm:$0xff]
    %v394 = vld [vmem:[#allocation8 + $0x98] sm:$0xff]
    %v395 = vld [vmem:[#allocation8 + $0xa0] sm:$0xff]
    %v396 = vld [vmem:[#allocation8 + $0xa8] sm:$0xff]
    %v397 = vld [vmem:[#allocation8 + $0xb0] sm:$0xff]
    %v398 = vld [vmem:[#allocation8 + $0xb8] sm:$0xff]
    %v399 = vld [vmem:[#allocation8 + $0xc0] sm:$0xff]
    %v400 = vld [vmem:[#allocation8 + $0xc8] sm:$0xff]
    %v401 = vld [vmem:[#allocation8 + $0xd0] sm:$0xff]
    %v402 = vld [vmem:[#allocation8 + $0xd8] sm:$0xff]
    %v403 = vld [vmem:[#allocation8 + $0xe0] sm:$0xff]
    %v404 = vld [vmem:[#allocation8 + $0xe8] sm:$0xff]
    %v405 = vld [vmem:[#allocation8 + $0xf0] sm:$0xff]
    %v406 = vld [vmem:[#allocation8 + $0xf8] sm:$0xff]
    %v407 = vld [vmem:[#allocation8 + $0x100] sm:$0xff]
    %v408 = vld [vmem:[#allocation8 + $0x108] sm:$0xff]
    %v409 = vld [vmem:[#allocation8 + $0x110] sm:$0xff]
    %v410 = vld [vmem:[#allocation8 + $0x118] sm:$0xff]
    %v411 = vld [vmem:[#allocation8 + $0x120] sm:$0xff]
    %v412 = vld [vmem:[#allocation8 + $0x128] sm:$0xff]
    %v413 = vld [vmem:[#allocation8 + $0x130] sm:$0xff]
    %v414 = vld [vmem:[#allocation8 + $0x138] sm:$0xff]
    %v415 = vld [vmem:[#allocation8 + $0x140] sm:$0xff]
    %v416 = vld [vmem:[#allocation8 + $0x148] sm:$0xff]
    %v417 = vld [vmem:[#allocation8 + $0x150] sm:$0xff]
    %v418 = vld [vmem:[#allocation8 + $0x158] sm:$0xff]
    %v419 = vld [vmem:[#allocation8 + $0x160] sm:$0xff]
    %v420 = vld [vmem:[#allocation8 + $0x168] sm:$0xff]
    %v421 = vld [vmem:[#allocation8 + $0x170] sm:$0xff]
    %v422 = vld [vmem:[#allocation8 + $0x178] sm:$0xff]
    %v423 = vld [vmem:[#allocation8 + $0x180] sm:$0xff]
    %v424 = vld [vmem:[#allocation8 + $0x188] sm:$0xff]
    %v425 = vld [vmem:[#allocation8 + $0x190] sm:$0xff]
    %v426 = vld [vmem:[#allocation8 + $0x198] sm:$0xff]
    %v427 = vld [vmem:[#allocation8 + $0x1a0] sm:$0xff]
    %v428 = vld [vmem:[#allocation8 + $0x1a8] sm:$0xff]
    %v429 = vld [vmem:[#allocation8 + $0x1b0] sm:$0xff]
    %v430 = vld [vmem:[#allocation8 + $0x1b8] sm:$0xff]
    %v431 = vld [vmem:[#allocation8 + $0x1c0] sm:$0xff]
    %v432 = vld [vmem:[#allocation8 + $0x1c8] sm:$0xff]
    %v433 = vld [vmem:[#allocation8 + $0x1d0] sm:$0xff]
    %v434 = vld [vmem:[#allocation8 + $0x1d8] sm:$0xff]
    %v435 = vld [vmem:[#allocation8 + $0x1e0] sm:$0xff]
    %v436 = vld [vmem:[#allocation8 + $0x1e8] sm:$0xff]
    %v437 = vld [vmem:[#allocation8 + $0x1f0] sm:$0xff]
    %v438 = vld [vmem:[#allocation8 + $0x1f8] sm:$0xff]
    %v503 = vunpack.c.l.b16 %v375
    %v504 = vunpack.c.h.b16 %v375
    %v505 = vunpack.c.l.b16 %v376
    %v506 = vunpack.c.h.b16 %v376
    %v507 = vunpack.c.l.b16 %v377
    %v508 = vunpack.c.h.b16 %v377
    %v509 = vunpack.c.l.b16 %v378
    %v510 = vunpack.c.h.b16 %v378
    %v511 = vunpack.c.l.b16 %v379
    %v512 = vunpack.c.h.b16 %v379
    %v513 = vunpack.c.l.b16 %v380
    %v514 = vunpack.c.h.b16 %v380
    %v515 = vunpack.c.l.b16 %v381
    %v516 = vunpack.c.h.b16 %v381
    %v517 = vunpack.c.l.b16 %v382
    %v518 = vunpack.c.h.b16 %v382
    %v519 = vunpack.c.l.b16 %v383
    %v520 = vunpack.c.h.b16 %v383
    %v521 = vunpack.c.l.b16 %v384
    %v522 = vunpack.c.h.b16 %v384
    %v523 = vunpack.c.l.b16 %v385
    %v524 = vunpack.c.h.b16 %v385
    %v525 = vunpack.c.l.b16 %v386
    %v526 = vunpack.c.h.b16 %v386
    %v527 = vunpack.c.l.b16 %v387
    %v528 = vunpack.c.h.b16 %v387
    %v529 = vunpack.c.l.b16 %v388
    %v530 = vunpack.c.h.b16 %v388
    %v531 = vunpack.c.l.b16 %v389
    %v532 = vunpack.c.h.b16 %v389
    %v533 = vunpack.c.l.b16 %v390
    %v534 = vunpack.c.h.b16 %v390
    %v535 = vunpack.c.l.b16 %v391
    %v536 = vunpack.c.h.b16 %v391
    %v537 = vunpack.c.l.b16 %v392
    %v538 = vunpack.c.h.b16 %v392
    %v539 = vunpack.c.l.b16 %v393
    %v540 = vunpack.c.h.b16 %v393
    %v541 = vunpack.c.l.b16 %v394
    %v542 = vunpack.c.h.b16 %v394
    %v543 = vunpack.c.l.b16 %v395
    %v544 = vunpack.c.h.b16 %v395
    %v545 = vunpack.c.l.b16 %v396
    %v546 = vunpack.c.h.b16 %v396
    %v547 = vunpack.c.l.b16 %v397
    %v548 = vunpack.c.h.b16 %v397
    %v549 = vunpack.c.l.b16 %v398
    %v550 = vunpack.c.h.b16 %v398
    %v551 = vunpack.c.l.b16 %v399
    %v552 = vunpack.c.h.b16 %v399
    %v553 = vunpack.c.l.b16 %v400
    %v554 = vunpack.c.h.b16 %v400
    %v555 = vunpack.c.l.b16 %v401
    %v556 = vunpack.c.h.b16 %v401
    %v557 = vunpack.c.l.b16 %v402
    %v558 = vunpack.c.h.b16 %v402
    %v559 = vunpack.c.l.b16 %v403
    %v560 = vunpack.c.h.b16 %v403
    %v561 = vunpack.c.l.b16 %v404
    %v562 = vunpack.c.h.b16 %v404
    %v563 = vunpack.c.l.b16 %v405
    %v564 = vunpack.c.h.b16 %v405
    %v565 = vunpack.c.l.b16 %v406
    %v566 = vunpack.c.h.b16 %v406
    %v567 = vunpack.c.l.b16 %v407
    %v568 = vunpack.c.h.b16 %v407
    %v569 = vunpack.c.l.b16 %v408
    %v570 = vunpack.c.h.b16 %v408
    %v571 = vunpack.c.l.b16 %v409
    %v572 = vunpack.c.h.b16 %v409
    %v573 = vunpack.c.l.b16 %v410
    %v574 = vunpack.c.h.b16 %v410
    %v575 = vunpack.c.l.b16 %v411
    %v576 = vunpack.c.h.b16 %v411
    %v577 = vunpack.c.l.b16 %v412
    %v578 = vunpack.c.h.b16 %v412
    %v579 = vunpack.c.l.b16 %v413
    %v580 = vunpack.c.h.b16 %v413
    %v581 = vunpack.c.l.b16 %v414
    %v582 = vunpack.c.h.b16 %v414
    %v583 = vunpack.c.l.b16 %v415
    %v584 = vunpack.c.h.b16 %v415
    %v585 = vunpack.c.l.b16 %v416
    %v586 = vunpack.c.h.b16 %v416
    %v587 = vunpack.c.l.b16 %v417
    %v588 = vunpack.c.h.b16 %v417
    %v589 = vunpack.c.l.b16 %v418
    %v590 = vunpack.c.h.b16 %v418
    %v591 = vunpack.c.l.b16 %v419
    %v592 = vunpack.c.h.b16 %v419
    %v593 = vunpack.c.l.b16 %v420
    %v594 = vunpack.c.h.b16 %v420
    %v595 = vunpack.c.l.b16 %v421
    %v596 = vunpack.c.h.b16 %v421
    %v597 = vunpack.c.l.b16 %v422
    %v598 = vunpack.c.h.b16 %v422
    %v599 = vunpack.c.l.b16 %v423
    %v600 = vunpack.c.h.b16 %v423
    %v601 = vunpack.c.l.b16 %v424
    %v602 = vunpack.c.h.b16 %v424
    %v603 = vunpack.c.l.b16 %v425
    %v604 = vunpack.c.h.b16 %v425
    %v605 = vunpack.c.l.b16 %v426
    %v606 = vunpack.c.h.b16 %v426
    %v607 = vunpack.c.l.b16 %v427
    %v608 = vunpack.c.h.b16 %v427
    %v609 = vunpack.c.l.b16 %v428
    %v610 = vunpack.c.h.b16 %v428
    %v611 = vunpack.c.l.b16 %v429
    %v612 = vunpack.c.h.b16 %v429
    %v613 = vunpack.c.l.b16 %v430
    %v614 = vunpack.c.h.b16 %v430
    %v615 = vunpack.c.l.b16 %v431
    %v616 = vunpack.c.h.b16 %v431
    %v617 = vunpack.c.l.b16 %v432
    %v618 = vunpack.c.h.b16 %v432
    %v619 = vunpack.c.l.b16 %v433
    %v620 = vunpack.c.h.b16 %v433
    %v621 = vunpack.c.l.b16 %v434
    %v622 = vunpack.c.h.b16 %v434
    %v623 = vunpack.c.l.b16 %v435
    %v624 = vunpack.c.h.b16 %v435
    %v625 = vunpack.c.l.b16 %v436
    %v626 = vunpack.c.h.b16 %v436
    %v627 = vunpack.c.l.b16 %v437
    %v628 = vunpack.c.h.b16 %v437
    %v629 = vunpack.c.l.b16 %v438
    %v630 = vunpack.c.h.b16 %v438
    %v631 = vpack.c.b16 %v511, %v503
    %v632 = vpack.c.b16 %v512, %v504
    %v633 = vpack.c.b16 %v513, %v505
    %v634 = vpack.c.b16 %v514, %v506
    %v635 = vpack.c.b16 %v515, %v507
    %v636 = vpack.c.b16 %v516, %v508
    %v637 = vpack.c.b16 %v517, %v509
    %v638 = vpack.c.b16 %v518, %v510
    %v639 = vpack.c.b16 %v527, %v519
    %v640 = vpack.c.b16 %v528, %v520
    %v641 = vpack.c.b16 %v529, %v521
    %v642 = vpack.c.b16 %v530, %v522
    %v643 = vpack.c.b16 %v531, %v523
    %v644 = vpack.c.b16 %v532, %v524
    %v645 = vpack.c.b16 %v533, %v525
    %v646 = vpack.c.b16 %v534, %v526
    %v647 = vpack.c.b16 %v543, %v535
    %v648 = vpack.c.b16 %v544, %v536
    %v649 = vpack.c.b16 %v545, %v537
    %v650 = vpack.c.b16 %v546, %v538
    %v651 = vpack.c.b16 %v547, %v539
    %v652 = vpack.c.b16 %v548, %v540
    %v653 = vpack.c.b16 %v549, %v541
    %v654 = vpack.c.b16 %v550, %v542
    %v655 = vpack.c.b16 %v559, %v551
    %v656 = vpack.c.b16 %v560, %v552
    %v657 = vpack.c.b16 %v561, %v553
    %v658 = vpack.c.b16 %v562, %v554
    %v659 = vpack.c.b16 %v563, %v555
    %v660 = vpack.c.b16 %v564, %v556
    %v661 = vpack.c.b16 %v565, %v557
    %v662 = vpack.c.b16 %v566, %v558
    %v663 = vpack.c.b16 %v575, %v567
    %v664 = vpack.c.b16 %v576, %v568
    %v665 = vpack.c.b16 %v577, %v569
    %v666 = vpack.c.b16 %v578, %v570
    %v667 = vpack.c.b16 %v579, %v571
    %v668 = vpack.c.b16 %v580, %v572
    %v669 = vpack.c.b16 %v581, %v573
    %v670 = vpack.c.b16 %v582, %v574
    %v671 = vpack.c.b16 %v591, %v583
    %v672 = vpack.c.b16 %v592, %v584
    %v673 = vpack.c.b16 %v593, %v585
    %v674 = vpack.c.b16 %v594, %v586
    %v675 = vpack.c.b16 %v595, %v587
    %v676 = vpack.c.b16 %v596, %v588
    %v677 = vpack.c.b16 %v597, %v589
    %v678 = vpack.c.b16 %v598, %v590
    %v679 = vpack.c.b16 %v607, %v599
    %v680 = vpack.c.b16 %v608, %v600
    %v681 = vpack.c.b16 %v609, %v601
    %v682 = vpack.c.b16 %v610, %v602
    %v683 = vpack.c.b16 %v611, %v603
    %v684 = vpack.c.b16 %v612, %v604
    %v685 = vpack.c.b16 %v613, %v605
    %v686 = vpack.c.b16 %v614, %v606
    %v687 = vpack.c.b16 %v623, %v615
    %v688 = vpack.c.b16 %v624, %v616
    %v689 = vpack.c.b16 %v625, %v617
    %v690 = vpack.c.b16 %v626, %v618
    %v691 = vpack.c.b16 %v627, %v619
    %v692 = vpack.c.b16 %v628, %v620
    %v693 = vpack.c.b16 %v629, %v621
    %v694 = vpack.c.b16 %v630, %v622
    %759 = vmatpush.bf16.msra.mxu0 %v687
    %760 = vmatpush.bf16.msra.mxu0 %v679
    %761 = vmatpush.bf16.msra.mxu0 %v671
    %762 = vmatpush.bf16.msra.mxu0 %v663
    %763 = vmatpush.bf16.msra.mxu0 %v655
    %764 = vmatpush.bf16.msra.mxu0 %v647
    %765 = vmatpush.bf16.msra.mxu0 %v639
    %766 = vmatpush.bf16.msra.mxu0 %v631
    %767 = vmatmul.bf16.gmra.mxu0 %v373
    %v768 = vpop.f32.mrf.mxu0
    %v769 = vadd.f32 0.0, %v768
    %v770 = vpop.f32.mrf.mxu0
    %v771 = vadd.f32 0.0, %v770
    %772 = vmatmul.bf16.gmra.mxu0 %v374
    %v773 = vpop.f32.mrf.mxu0
    %v774 = vadd.f32 0.0, %v773
    %v775 = vpop.f32.mrf.mxu0
    %v776 = vadd.f32 0.0, %v775
    %777 = vdwg.mxu0
    %778 = vmatpush.bf16.msra.mxu0 %v688
    %779 = vmatpush.bf16.msra.mxu0 %v680
    %780 = vmatpush.bf16.msra.mxu0 %v672
    %781 = vmatpush.bf16.msra.mxu0 %v664
    %782 = vmatpush.bf16.msra.mxu0 %v656
    %783 = vmatpush.bf16.msra.mxu0 %v648
    %784 = vmatpush.bf16.msra.mxu0 %v640
    %785 = vmatpush.bf16.msra.mxu0 %v632
    %786 = vmatmul.bf16.gmra.mxu0 %v373
    %v787 = vpop.f32.mrf.mxu0
    %v788 = vadd.f32 0.0, %v787
    %v789 = vpop.f32.mrf.mxu0
    %v790 = vadd.f32 0.0, %v789
    %791 = vmatmul.bf16.gmra.mxu0 %v374
    %v792 = vpop.f32.mrf.mxu0
    %v793 = vadd.f32 0.0, %v792
    %v794 = vpop.f32.mrf.mxu0
    %v795 = vadd.f32 0.0, %v794
    %796 = vdwg.mxu0
    %797 = vmatpush.bf16.msra.mxu0 %v689
    %798 = vmatpush.bf16.msra.mxu0 %v681
    %799 = vmatpush.bf16.msra.mxu0 %v673
    %800 = vmatpush.bf16.msra.mxu0 %v665
    %801 = vmatpush.bf16.msra.mxu0 %v657
    %802 = vmatpush.bf16.msra.mxu0 %v649
    %803 = vmatpush.bf16.msra.mxu0 %v641
    %804 = vmatpush.bf16.msra.mxu0 %v633
    %805 = vmatmul.bf16.gmra.mxu0 %v373
    %v806 = vpop.f32.mrf.mxu0
    %v807 = vadd.f32 0.0, %v806
    %v808 = vpop.f32.mrf.mxu0
    %v809 = vadd.f32 0.0, %v808
    %810 = vmatmul.bf16.gmra.mxu0 %v374
    %v811 = vpop.f32.mrf.mxu0
    %v812 = vadd.f32 0.0, %v811
    %v813 = vpop.f32.mrf.mxu0
    %v814 = vadd.f32 0.0, %v813
    %815 = vdwg.mxu0
    %816 = vmatpush.bf16.msra.mxu0 %v690
    %817 = vmatpush.bf16.msra.mxu0 %v682
    %818 = vmatpush.bf16.msra.mxu0 %v674
    %819 = vmatpush.bf16.msra.mxu0 %v666
    %820 = vmatpush.bf16.msra.mxu0 %v658
    %821 = vmatpush.bf16.msra.mxu0 %v650
    %822 = vmatpush.bf16.msra.mxu0 %v642
    %823 = vmatpush.bf16.msra.mxu0 %v634
    %824 = vmatmul.bf16.gmra.mxu0 %v373
    %v825 = vpop.f32.mrf.mxu0
    %v826 = vadd.f32 0.0, %v825
    %v827 = vpop.f32.mrf.mxu0
    %v828 = vadd.f32 0.0, %v827
    %829 = vmatmul.bf16.gmra.mxu0 %v374
    %v830 = vpop.f32.mrf.mxu0
    %v831 = vadd.f32 0.0, %v830
    %v832 = vpop.f32.mrf.mxu0
    %v833 = vadd.f32 0.0, %v832
    %834 = vdwg.mxu0
    %835 = vmatpush.bf16.msra.mxu0 %v691
    %836 = vmatpush.bf16.msra.mxu0 %v683
    %837 = vmatpush.bf16.msra.mxu0 %v675
    %838 = vmatpush.bf16.msra.mxu0 %v667
    %839 = vmatpush.bf16.msra.mxu0 %v659
    %840 = vmatpush.bf16.msra.mxu0 %v651
    %841 = vmatpush.bf16.msra.mxu0 %v643
    %842 = vmatpush.bf16.msra.mxu0 %v635
    %843 = vmatmul.bf16.gmra.mxu0 %v373
    %v844 = vpop.f32.mrf.mxu0
    %v845 = vadd.f32 0.0, %v844
    %v846 = vpop.f32.mrf.mxu0
    %v847 = vadd.f32 0.0, %v846
    %848 = vmatmul.bf16.gmra.mxu0 %v374
    %v849 = vpop.f32.mrf.mxu0
    %v850 = vadd.f32 0.0, %v849
    %v851 = vpop.f32.mrf.mxu0
    %v852 = vadd.f32 0.0, %v851
    %853 = vdwg.mxu0
    %854 = vmatpush.bf16.msra.mxu0 %v692
    %855 = vmatpush.bf16.msra.mxu0 %v684
    %856 = vmatpush.bf16.msra.mxu0 %v676
    %857 = vmatpush.bf16.msra.mxu0 %v668
    %858 = vmatpush.bf16.msra.mxu0 %v660
    %859 = vmatpush.bf16.msra.mxu0 %v652
    %860 = vmatpush.bf16.msra.mxu0 %v644
    %861 = vmatpush.bf16.msra.mxu0 %v636
    %862 = vmatmul.bf16.gmra.mxu0 %v373
    %v863 = vpop.f32.mrf.mxu0
    %v864 = vadd.f32 0.0, %v863
    %v865 = vpop.f32.mrf.mxu0
    %v866 = vadd.f32 0.0, %v865
    %867 = vmatmul.bf16.gmra.mxu0 %v374
    %v868 = vpop.f32.mrf.mxu0
    %v869 = vadd.f32 0.0, %v868
    %v870 = vpop.f32.mrf.mxu0
    %v871 = vadd.f32 0.0, %v870
    %872 = vdwg.mxu0
    %873 = vmatpush.bf16.msra.mxu0 %v693
    %874 = vmatpush.bf16.msra.mxu0 %v685
    %875 = vmatpush.bf16.msra.mxu0 %v677
    %876 = vmatpush.bf16.msra.mxu0 %v669
    %877 = vmatpush.bf16.msra.mxu0 %v661
    %878 = vmatpush.bf16.msra.mxu0 %v653
    %879 = vmatpush.bf16.msra.mxu0 %v645
    %880 = vmatpush.bf16.msra.mxu0 %v637
    %881 = vmatmul.bf16.gmra.mxu0 %v373
    %v882 = vpop.f32.mrf.mxu0
    %v883 = vadd.f32 0.0, %v882
    %v884 = vpop.f32.mrf.mxu0
    %v885 = vadd.f32 0.0, %v884
    %886 = vmatmul.bf16.gmra.mxu0 %v374
    %v887 = vpop.f32.mrf.mxu0
    %v888 = vadd.f32 0.0, %v887
    %v889 = vpop.f32.mrf.mxu0
    %v890 = vadd.f32 0.0, %v889
    %891 = vdwg.mxu0
    %892 = vmatpush.bf16.msra.mxu0 %v694
    %893 = vmatpush.bf16.msra.mxu0 %v686
    %894 = vmatpush.bf16.msra.mxu0 %v678
    %895 = vmatpush.bf16.msra.mxu0 %v670
    %896 = vmatpush.bf16.msra.mxu0 %v662
    %897 = vmatpush.bf16.msra.mxu0 %v654
    %898 = vmatpush.bf16.msra.mxu0 %v646
    %899 = vmatpush.bf16.msra.mxu0 %v638
    %900 = vmatmul.bf16.gmra.mxu0 %v373
    %v901 = vpop.f32.mrf.mxu0
    %v902 = vadd.f32 0.0, %v901
    %v903 = vpop.f32.mrf.mxu0
    %v904 = vadd.f32 0.0, %v903
    %905 = vmatmul.bf16.gmra.mxu0 %v374
    %v906 = vpop.f32.mrf.mxu0
    %v907 = vadd.f32 0.0, %v906
    %v908 = vpop.f32.mrf.mxu0
    %v909 = vadd.f32 0.0, %v908
    %910 = vdwg.mxu0
    %911 = vst.msk [vmem:[#allocation11] sm:$0xff] %vm213, %v230
    %912 = vst.msk [vmem:[#allocation11 + $0x8] sm:$0xff] %vm213, %v232
    %v913 = vmax.f32 %v769, %v771
    %v914 = vrot.slane %v913, 4
    %v915 = vmax.f32 %v913, %v914
    %v916 = vrot.slane %v915, 2
    %v917 = vmax.f32 %v915, %v916
    %v918 = vrot.slane %v917, 1
    %v919 = vmax.f32 %v917, %v918
    %v920 = vmax.f32 %v788, %v790
    %v921 = vrot.slane %v920, 4
    %v922 = vmax.f32 %v920, %v921
    %v923 = vrot.slane %v922, 2
    %v924 = vmax.f32 %v922, %v923
    %v925 = vrot.slane %v924, 1
    %v926 = vmax.f32 %v924, %v925
    %v927 = vmax.f32 %v807, %v809
    %v928 = vrot.slane %v927, 4
    %v929 = vmax.f32 %v927, %v928
    %v930 = vrot.slane %v929, 2
    %v931 = vmax.f32 %v929, %v930
    %v932 = vrot.slane %v931, 1
    %v933 = vmax.f32 %v931, %v932
    %v934 = vmax.f32 %v826, %v828
    %v935 = vrot.slane %v934, 4
    %v936 = vmax.f32 %v934, %v935
    %v937 = vrot.slane %v936, 2
    %v938 = vmax.f32 %v936, %v937
    %v939 = vrot.slane %v938, 1
    %v940 = vmax.f32 %v938, %v939
    %v941 = vmax.f32 %v845, %v847
    %v942 = vrot.slane %v941, 4
    %v943 = vmax.f32 %v941, %v942
    %v944 = vrot.slane %v943, 2
    %v945 = vmax.f32 %v943, %v944
    %v946 = vrot.slane %v945, 1
    %v947 = vmax.f32 %v945, %v946
    %v948 = vmax.f32 %v864, %v866
    %v949 = vrot.slane %v948, 4
    %v950 = vmax.f32 %v948, %v949
    %v951 = vrot.slane %v950, 2
    %v952 = vmax.f32 %v950, %v951
    %v953 = vrot.slane %v952, 1
    %v954 = vmax.f32 %v952, %v953
    %v955 = vmax.f32 %v883, %v885
    %v956 = vrot.slane %v955, 4
    %v957 = vmax.f32 %v955, %v956
    %v958 = vrot.slane %v957, 2
    %v959 = vmax.f32 %v957, %v958
    %v960 = vrot.slane %v959, 1
    %v961 = vmax.f32 %v959, %v960
    %v962 = vmax.f32 %v902, %v904
    %v963 = vrot.slane %v962, 4
    %v964 = vmax.f32 %v962, %v963
    %v965 = vrot.slane %v964, 2
    %v966 = vmax.f32 %v964, %v965
    %v967 = vrot.slane %v966, 1
    %v968 = vmax.f32 %v966, %v967
    %v969 = vld [vmem:[#allocation10] ss:$2 sm:$0xff]
    %v978 = vrot.slane %v926, 7
    %v979 = vrot.slane %v933, 6
    %v980 = vrot.slane %v940, 5
    %v981 = vrot.slane %v947, 4
    %v982 = vrot.slane %v954, 3
    %v983 = vrot.slane %v961, 2
    %v984 = vrot.slane %v968, 1
    %vm985 = vcmask 1040384
    %v986 = vsel %vm985, %v919, %v978
    %vm987 = vcmask 1042434
    %v988 = vsel %vm987, %v979, %v980
    %vm989 = vcmask 1041408
    %v990 = vsel %vm989, %v986, %v988
    %vm991 = vcmask 1044484
    %v992 = vsel %vm991, %v981, %v982
    %vm993 = vcmask 1046534
    %v994 = vsel %vm993, %v983, %v984
    %vm995 = vcmask 1045508
    %v996 = vsel %vm995, %v992, %v994
    %v997 = vsel %vm148, %v990, %v996
    %v999 = vmax.f32 %v969, %v997
    %1000 = vst [vmem:[#allocation10] ss:$2 sm:$0xff] %v999
    %s1001 = scalar_lea.vmem [#allocation11], 16
    %1002 = vst.msk [vmem:[%s1001] sm:$0xff] %vm213, %v235
    %1003 = vst.msk [vmem:[%s1001 + $0x8] sm:$0xff] %vm213, %v237
    %v1004 = vmax.f32 %v774, %v776
    %v1005 = vrot.slane %v1004, 4
    %v1006 = vmax.f32 %v1004, %v1005
    %v1007 = vrot.slane %v1006, 2
    %v1008 = vmax.f32 %v1006, %v1007
    %v1009 = vrot.slane %v1008, 1
    %v1010 = vmax.f32 %v1008, %v1009
    %v1011 = vmax.f32 %v793, %v795
    %v1012 = vrot.slane %v1011, 4
    %v1013 = vmax.f32 %v1011, %v1012
    %v1014 = vrot.slane %v1013, 2
    %v1015 = vmax.f32 %v1013, %v1014
    %v1016 = vrot.slane %v1015, 1
    %v1017 = vmax.f32 %v1015, %v1016
    %v1018 = vmax.f32 %v812, %v814
    %v1019 = vrot.slane %v1018, 4
    %v1020 = vmax.f32 %v1018, %v1019
    %v1021 = vrot.slane %v1020, 2
    %v1022 = vmax.f32 %v1020, %v1021
    %v1023 = vrot.slane %v1022, 1
    %v1024 = vmax.f32 %v1022, %v1023
    %v1025 = vmax.f32 %v831, %v833
    %v1026 = vrot.slane %v1025, 4
    %v1027 = vmax.f32 %v1025, %v1026
    %v1028 = vrot.slane %v1027, 2
    %v1029 = vmax.f32 %v1027, %v1028
    %v1030 = vrot.slane %v1029, 1
    %v1031 = vmax.f32 %v1029, %v1030
    %v1032 = vmax.f32 %v850, %v852
    %v1033 = vrot.slane %v1032, 4
    %v1034 = vmax.f32 %v1032, %v1033
    %v1035 = vrot.slane %v1034, 2
    %v1036 = vmax.f32 %v1034, %v1035
    %v1037 = vrot.slane %v1036, 1
    %v1038 = vmax.f32 %v1036, %v1037
    %v1039 = vmax.f32 %v869, %v871
    %v1040 = vrot.slane %v1039, 4
    %v1041 = vmax.f32 %v1039, %v1040
    %v1042 = vrot.slane %v1041, 2
    %v1043 = vmax.f32 %v1041, %v1042
    %v1044 = vrot.slane %v1043, 1
    %v1045 = vmax.f32 %v1043, %v1044
    %v1046 = vmax.f32 %v888, %v890
    %v1047 = vrot.slane %v1046, 4
    %v1048 = vmax.f32 %v1046, %v1047
    %v1049 = vrot.slane %v1048, 2
    %v1050 = vmax.f32 %v1048, %v1049
    %v1051 = vrot.slane %v1050, 1
    %v1052 = vmax.f32 %v1050, %v1051
    %v1053 = vmax.f32 %v907, %v909
    %v1054 = vrot.slane %v1053, 4
    %v1055 = vmax.f32 %v1053, %v1054
    %v1056 = vrot.slane %v1055, 2
    %v1057 = vmax.f32 %v1055, %v1056
    %v1058 = vrot.slane %v1057, 1
    %v1059 = vmax.f32 %v1057, %v1058
    %s1060 = scalar_lea.vmem [#allocation10], 1
    %v1061 = vld [vmem:[%s1060] ss:$2 sm:$0xff]
    %v1070 = vrot.slane %v1017, 7
    %v1071 = vrot.slane %v1024, 6
    %v1072 = vrot.slane %v1031, 5
    %v1073 = vrot.slane %v1038, 4
    %v1074 = vrot.slane %v1045, 3
    %v1075 = vrot.slane %v1052, 2
    %v1076 = vrot.slane %v1059, 1
    %v1077 = vsel %vm985, %v1010, %v1070
    %v1078 = vsel %vm987, %v1071, %v1072
    %v1079 = vsel %vm989, %v1077, %v1078
    %v1080 = vsel %vm991, %v1073, %v1074
    %v1081 = vsel %vm993, %v1075, %v1076
    %v1082 = vsel %vm995, %v1080, %v1081
    %v1083 = vsel %vm148, %v1079, %v1082
    %v1085 = vmax.f32 %v1061, %v1083
    %1086 = vst [vmem:[%s1060] ss:$2 sm:$0xff] %v1085
    // Predicated region
    $region66: #{tpu_custom_call.1} parent=1 // pred_check
      %p1087 = pneg %p124
    $region67: #{tpu_custom_call.1} parent=1 // pred_check_branch
      %1089 = sbr.rel (%p1087) target = $region69
    $region68: #{tpu_custom_call.1} parent=1 // pred_region
      %v1090 = vld [vmem:[#allocation10] sm:$0xff]
      %v1091 = vld [vmem:[#allocation10 + $0x8] sm:$0xff]
      %v1092 = vld [vmem:[%s10] sm:$0xff]
      %v1094 = vperm.slane %v1092, 0
      %v1095 = vperm.slane %v1092, 1
      %v1096 = vperm.slane %v1092, 2
      %v1097 = vperm.slane %v1092, 3
      %v1098 = vperm.slane %v1092, 4
      %v1099 = vperm.slane %v1092, 5
      %v1100 = vperm.slane %v1092, 6
      %v1101 = vperm.slane %v1092, 7
      %v1102 = vrot.slane %v1095, 6
      %v1103 = vrot.slane %v1096, 4
      %v1104 = vrot.slane %v1097, 2
      %v1105 = vrot.slane %v1099, 6
      %v1106 = vrot.slane %v1100, 4
      %v1107 = vrot.slane %v1101, 2
      %v1108 = vsel %vm989, %v1094, %v1102
      %v1109 = vsel %vm995, %v1103, %v1104
      %v1110 = vsel %vm148, %v1108, %v1109
      %v1111 = vsel %vm989, %v1098, %v1105
      %v1112 = vsel %vm995, %v1106, %v1107
      %v1113 = vsel %vm148, %v1111, %v1112
      %v1116 = vadd.f32 %v1090, %v1110
      %v1117 = vadd.f32 %v1091, %v1113
      %1118 = vst [vmem:[#allocation10] sm:$0xff] %v1116
      %1119 = vst [vmem:[#allocation10 + $0x8] sm:$0xff] %v1117
    $region69: #{tpu_custom_call.1} parent=1 // pred_fallthru
      _
    // Predicated region
    $region70: #{tpu_custom_call.1} parent=1 // pred_check
      _
    $region71: #{tpu_custom_call.1} parent=1 // pred_check_branch
      %1121 = sbr.rel (0) target = $region73
    $region72: #{tpu_custom_call.1} parent=1 // pred_region
      %1123 = vsyncadd [#allocation4], 0
      %s1125 = sshll.u32 [#allocation10], 4
      %s1126 = int_to_ptr.vmem [resolvable:$true] %s1125
      %s1127 = sshll.u32 %s11, 4
      %s1128 = int_to_ptr.hbm [resolvable:$true] %s1127
      %1130 = dma.vmem_to_hbm [thread:$0]  %s1126, 256, %s1128, [#allocation4]
    $region73: #{tpu_custom_call.1} parent=1 // pred_fallthru
      _
    // Predicated region
    $region74: #{tpu_custom_call.1} parent=1 // pred_check
      _
    $region75: #{tpu_custom_call.1} parent=1 // pred_check_branch
      %1132 = sbr.rel (0) target = $region77
    $region76: #{tpu_custom_call.1} parent=1 // pred_region
      %1134 = vsyncadd [#allocation12], 0
      %s1135 = sshll.u32 [#allocation11], 4
      %s1136 = int_to_ptr.vmem [resolvable:$true] %s1135
      %s1137 = sshll.u32 %s12, 4
      %s1138 = int_to_ptr.hbm [resolvable:$true] %s1137
      %1143 = dma.vmem_to_hbm [thread:$0]  %s1136, 512, %s1138, [#allocation12], 128, 128, 8
    $region77: #{tpu_custom_call.1} parent=1 // pred_fallthru
      _
    // Predicated region
    $region78: #{tpu_custom_call.1} parent=1 // pred_check
      _
    $region79: #{tpu_custom_call.1} parent=1 // pred_check_branch
      %1145 = sbr.rel (0) target = $region81
    $region80: #{tpu_custom_call.1} parent=1 // pred_region
      %1147 = dma.done [#allocation4], 256
    $region81: #{tpu_custom_call.1} parent=1 // pred_fallthru
      _
    // Predicated region
    $region82: #{tpu_custom_call.1} parent=1 // pred_check
      _
    $region83: #{tpu_custom_call.1} parent=1 // pred_check_branch
      %1149 = sbr.rel (0) target = $region85
    $region84: #{tpu_custom_call.1} parent=1 // pred_region
      %1151 = dma.done [#allocation12], 512
    $region85: #{tpu_custom_call.1} parent=1 // pred_fallthru
      _
    %1152 = vsyncpa [#allocation3], 1
    %1153 = vsyncpa [#allocation6], 1
    %1154 = vsyncpa [#allocation9], 1
    %1155 = vsyncpa [#allocation4], 1
    %1156 = vsyncpa [#allocation12], 1

</llo_original>
